<compile_context>
chip_gen: v6e
topology: v6e:2x2x1
jax: 0.10.0
libtpu: 0.0.40
codegen_flags: <defaults>
</compile_context>

<pallas_src>
import functools
import math

import jax
import jax.numpy as jnp
from jax.experimental import pallas as pl
from jax.experimental.pallas import tpu as pltpu


# ----------------------------------------------------------------------------
# Activations (exact semantics of the PyTorch modules with default args)
# ----------------------------------------------------------------------------
def _relu(x):
    return jnp.maximum(x, 0.0)


def _sigmoid(x):
    return jax.nn.sigmoid(x)


def _leaky_relu(x):
    return jnp.where(x >= 0.0, x, 0.01 * x)  # negative_slope = 0.01 (default)


def _elu(x):
    # alpha = 1.0 (default); expm1 for stability, clamp arg for safety
    return jnp.where(x > 0.0, x, jnp.expm1(jnp.minimum(x, 0.0)))


def _tanh(x):
    return jnp.tanh(x)


def _silu(x):
    return x * jax.nn.sigmoid(x)


def _identity(x):
    return x


_ACTIVATION_MAP = {
    "ReLU": _relu,
    "Sigmoid": _sigmoid,
    "LeakyReLU": _leaky_relu,
    "ELU": _elu,
    "Tanh": _tanh,
    "SiLU": _silu,
    "Identity": _identity,
}


# ----------------------------------------------------------------------------
# Small helpers
# ----------------------------------------------------------------------------
def _round_up(n, m):
    return pl.cdiv(n, m) * m


def _vmem_capacity_bytes():
    try:
        return int(pltpu.get_tpu_info().vmem_capacity_bytes)
    except Exception:
        return 64 * 2**20  # conservative default (v7x per-core VMEM)


# ----------------------------------------------------------------------------
# One-time parameter prep (pad + cast hoisted out of the forward pass)
# ----------------------------------------------------------------------------
def prepare_mlp_params(params, *, lane=128, compute_dtype=jnp.bfloat16):
    """Zero-pad output feature dims to lane multiples and cast weights once.

    Weight l is stored (in_features, out_features) so the kernel computes
    y = x @ W + b (== x @ W_pt.T + b for the PyTorch layout).
    """
    dims = [params[0][0].shape[0]] + [w.shape[1] for (w, _) in params]
    out_pad = [_round_up(d, lane) for d in dims[1:]]
    in_pad = [dims[0]] + out_pad[:-1]   # layer-0 K stays unpadded (matches raw x)

    prepped = []
    for l, (w, b) in enumerate(params):
        din, dout = w.shape
        assert din == dims[l]
        wp = jnp.pad(w, ((0, in_pad[l] - din), (0, out_pad[l] - dout)))
        bp = jnp.pad(b, (0, out_pad[l] - dout)).reshape(1, out_pad[l])
        prepped.append((wp.astype(compute_dtype), bp.astype(jnp.float32)))

    return dict(params=prepped, dims=dims, in_pad=in_pad, out_pad=out_pad,
                compute_dtype=compute_dtype)


# ----------------------------------------------------------------------------
# Fused kernel: all layers in one pallas_call, weights VMEM-resident
# ----------------------------------------------------------------------------
def _mlp_fused_kernel(x_ref, *refs, act_fns, compute_dtype, precision):
    """refs = (w0, b0, w1, b1, ..., wL, bL, o_ref)."""
    n_layers = len(act_fns)
    param_refs = refs[: 2 * n_layers]
    o_ref = refs[2 * n_layers]

    h = x_ref[...].astype(jnp.float32)              # (TM, Din)
    for l, act in enumerate(act_fns):
        w = param_refs[2 * l][...]                  # (Kl, Nl) compute_dtype
        b = param_refs[2 * l + 1][...]              # (1, Nl) f32
        y = jnp.dot(h.astype(compute_dtype), w,
                    preferred_element_type=jnp.float32,
                    precision=precision) + b
        h = act(y)                                  # f32, never leaves VMEM
    o_ref[...] = h.astype(o_ref.dtype)


def _fused_vmem_bytes(b_tile, din, in_pad, out_pad, compute_dtype, weight_buffers):
    wsz = jnp.dtype(compute_dtype).itemsize
    w_bytes = sum(k * n for k, n in zip(in_pad, out_pad)) * wsz * weight_buffers
    b_bytes = sum(out_pad) * 4 * weight_buffers
    x_bytes = 2 * b_tile * din * 4                  # double-buffered x tile
    o_bytes = 2 * b_tile * out_pad[-1] * 4          # double-buffered out tile
    h_bytes = 3 * b_tile * max([din] + list(out_pad)) * 4   # f32 h / cast / y
    return w_bytes + b_bytes + x_bytes + o_bytes + h_bytes


def _fused_forward(x, prepped, act_fns, *, tm_eff, precision, vmem_limit,
                   single_buffer_weights):
    params = prepped["params"]
    in_pad, out_pad = prepped["in_pad"], prepped["out_pad"]
    compute_dtype = prepped["compute_dtype"]
    B, din = x.shape
    n_layers = len(params)

    # Constant index_map -> never re-DMA'd across grid steps; single-buffering
    # halves resident-weight VMEM.
    wkw = dict(pipeline_mode=pl.Buffered(1)) if single_buffer_weights else {}

    in_specs = [pl.BlockSpec((tm_eff, din), lambda i: (i, 0))]
    for l in range(n_layers):
        in_specs.append(
            pl.BlockSpec((in_pad[l], out_pad[l]), lambda i: (0, 0), **wkw))
        in_specs.append(
            pl.BlockSpec((1, out_pad[l]), lambda i: (0, 0), **wkw))

    flat = [p for pair in params for p in pair]
    kernel = functools.partial(_mlp_fused_kernel, act_fns=act_fns,
                               compute_dtype=compute_dtype, precision=precision)

    # TODO(synk): on v7x verify the "parallel" batch axis actually shards across
    # the two TensorCores; otherwise switch to pltpu.CORE_PARALLEL / pl.core_map.
    return pl.pallas_call(
        kernel,
        out_shape=jax.ShapeDtypeStruct((B, out_pad[-1]), jnp.float32),
        grid_spec=pltpu.PrefetchScalarGridSpec(
            num_scalar_prefetch=0,
            grid=(pl.cdiv(B, tm_eff),),
            in_specs=in_specs,
            out_specs=pl.BlockSpec((tm_eff, out_pad[-1]), lambda i: (i, 0)),
        ),
        compiler_params=pltpu.CompilerParams(
            dimension_semantics=("parallel",),
            vmem_limit_bytes=vmem_limit,
        ),
    )(x, *flat)


# ----------------------------------------------------------------------------
# Per-layer K/N-tiled fallback (weights too large to stay fully VMEM-resident)
# ----------------------------------------------------------------------------
def _linear_act_kernel(x_ref, w_ref, b_ref, o_ref, acc_ref, *, act,
                       compute_dtype, precision):
    @pl.when(pl.program_id(2) == 0)
    def _():
        acc_ref[...] = jnp.zeros_like(acc_ref)

    acc_ref[...] += jnp.dot(x_ref[...].astype(compute_dtype),
                            w_ref[...].astype(compute_dtype),
                            preferred_element_type=jnp.float32,
                            precision=precision)

    @pl.when(pl.program_id(2) == pl.num_programs(2) - 1)
    def _():
        o_ref[...] = act(acc_ref[...] + b_ref[...]).astype(o_ref.dtype)


def _pick_tile(dim, candidates=(512, 256, 128)):
    for c in candidates:
        if dim % c == 0:
            return c
    return dim  # full-dim block (exempt from the (8,128) rule)


def _linear_act(x, w, b, act, *, tm, compute_dtype, precision, out_dtype):
    B, K = x.shape
    Kw, N = w.shape
    assert K == Kw
    tm_eff = min(tm, _round_up(B, 8))
    # K blocks must tile K exactly (OOB reads along K would pollute the
    # accumulator); N is lane-padded in prepare_mlp_params so 128 always works.
    tk = _pick_tile(K)
    tn = _pick_tile(N)

    cap = _vmem_capacity_bytes()
    need = (2 * (tm_eff * tk * x.dtype.itemsize + tk * tn * w.dtype.itemsize
                 + tn * 4 + tm_eff * tn * 4) + tm_eff * tn * 4)
    vmem_limit = int(min(0.85 * cap, max(2 * need, 32 * 2**20)))

    kernel = functools.partial(_linear_act_kernel, act=act,
                               compute_dtype=compute_dtype, precision=precision)
    return pl.pallas_call(
        kernel,
        out_shape=jax.ShapeDtypeStruct((B, N), out_dtype),
        grid_spec=pltpu.PrefetchScalarGridSpec(
            num_scalar_prefetch=0,
            grid=(pl.cdiv(B, tm_eff), N // tn, K // tk),
            in_specs=[pl.BlockSpec((tm_eff, tk), lambda i, j, k: (i, k)),
                      pl.BlockSpec((tk, tn), lambda i, j, k: (k, j)),
                      pl.BlockSpec((1, tn), lambda i, j, k: (0, j))],
            out_specs=pl.BlockSpec((tm_eff, tn), lambda i, j, k: (i, j)),
            scratch_shapes=[pltpu.VMEM((tm_eff, tn), jnp.float32)],
        ),
        compiler_params=pltpu.CompilerParams(
            dimension_semantics=("parallel", "parallel", "arbitrary"),
            vmem_limit_bytes=vmem_limit,
        ),
    )(x, w, b)


def _tiled_forward(x, prepped, act_fns, *, tm, precision):
    params = prepped["params"]
    compute_dtype = prepped["compute_dtype"]
    h = x
    for (w, b), act in zip(params, act_fns):
        # Intermediates kept f32 between layers (matches the fused path).
        h = _linear_act(h, w, b, act, tm=tm, compute_dtype=compute_dtype,
                        precision=precision, out_dtype=jnp.float32)
    return h


# ----------------------------------------------------------------------------
# Public forward
# ----------------------------------------------------------------------------
def mlp_forward(x, prepped, activation_list, *, tm=256, precision=None,
                use_fused=None):
    """Forward pass: x (B, Din) f32 -> (B, Dout) f32.

    tm: batch tile.  256 fills the 256x256 MXU on v6e/v7x; use 128 on v5e.
    """
    params = prepped["params"]
    dims = prepped["dims"]
    in_pad, out_pad = prepped["in_pad"], prepped["out_pad"]
    compute_dtype = prepped["compute_dtype"]

    n_layers = len(params)
    assert len(activation_list) == n_layers, (
        "Need exactly one activation per Linear layer "
        "(len(hidden_layers) + 1 activations in total)")
    B, din = x.shape
    assert din == dims[0]
    act_fns = tuple(_ACTIVATION_MAP[a] for a in activation_list)

    tm_eff = min(tm, _round_up(B, 8))

    cap = _vmem_capacity_bytes()
    need = _fused_vmem_bytes(tm_eff, din, in_pad, out_pad, compute_dtype,
                             weight_buffers=1)
    if use_fused is None:
        use_fused = need <= 0.7 * cap   # headroom for compiler scratch

    if use_fused:
        # Budget also covers the double-buffered fallback; capped below capacity.
        vmem_limit = int(min(0.9 * cap, max(2 * need, 32 * 2**20)))
        try:
            out = _fused_forward(x, prepped, act_fns, tm_eff=tm_eff,
                                 precision=precision, vmem_limit=vmem_limit,
                                 single_buffer_weights=True)
        except Exception:
            # Some JAX versions may reject Buffered(1); retry double-buffered.
            out = _fused_forward(x, prepped, act_fns, tm_eff=tm_eff,
                                 precision=precision, vmem_limit=vmem_limit,
                                 single_buffer_weights=False)
    else:
        out = _tiled_forward(x, prepped, act_fns, tm=tm, precision=precision)

    # Only lane-padded output columns are sliced off (batch was never padded).
    # TODO(synk): for Dout << 128, emit the kernel output in bf16 and cast here
    # to halve the lane-padding writeback when f32 outputs aren't required.
    return out[:, :dims[-1]]


# ----------------------------------------------------------------------------
# Parameter init (mirrors nn.Linear default: U(-1/sqrt(fan_in), +1/sqrt(fan_in)))
# ----------------------------------------------------------------------------
def init_mlp_params(cfg, key):
    dims = [cfg["input_dim"]] + list(cfg["hidden_layers"]) + [cfg["output_dim"]]
    params = []
    for din, dout in zip(dims[:-1], dims[1:]):
        key, kw, kb = jax.random.split(key, 3)
        bound = 1.0 / math.sqrt(din)
        w = jax.random.uniform(kw, (din, dout), jnp.float32, -bound, bound)
        b = jax.random.uniform(kb, (dout,), jnp.float32, -bound, bound)
        params.append((w, b))
    return params


def mlp_reference(x, params, activation_list):
    h = x
    for (w, b), name in zip(params, activation_list):
        h = _ACTIVATION_MAP[name](h @ w + b)
    return h


# ----------------------------------------------------------------------------
# Main
# ----------------------------------------------------------------------------
if __name__ == "__main__":
    cfg_MLP = {
        "input_dim": 16,
        "output_dim": 4,
        "hidden_layers": [32, 32],
        # one activation per hidden layer + one for the output layer
        "linear_activation_list": ["ReLU", "Tanh", "Sigmoid"],
    }

    key = jax.random.PRNGKey(0)
    key, kx = jax.random.split(key)

    batch = 8
    x = jax.random.normal(kx, (batch, cfg_MLP["input_dim"]), jnp.float32)
    params = init_mlp_params(cfg_MLP, key)
    acts = cfg_MLP["linear_activation_list"]

    # One-time prep (pad + bf16 cast), reused across forward calls.
    prepped = prepare_mlp_params(params, compute_dtype=jnp.bfloat16)

    ref = mlp_reference(x, params, acts)

    # Fused path (auto-selected for this size).
    out = jax.block_until_ready(mlp_forward(x, prepped, acts))
    assert out.shape == (batch, cfg_MLP["output_dim"])
    assert out.dtype == jnp.float32
    assert float(jnp.max(jnp.abs(out - ref))) < 2e-2          # bf16 tolerance
    assert bool(jnp.all((out >= 0.0) & (out <= 1.0)))          # Sigmoid range

    # Also exercise the K/N-tiled fallback (used when weights exceed VMEM).
    out_t = jax.block_until_ready(mlp_forward(x, prepped, acts, use_fused=False))
    assert out_t.shape == (batch, cfg_MLP["output_dim"])
    assert float(jnp.max(jnp.abs(out_t - ref))) < 2e-2

    print("KERNEL_OK")
</pallas_src>

<mosaic_0001>
module attributes {stable_mosaic.version = 11 : i64} {
  func.func @_mlp_fused_kernel(%arg0: i32, %arg1: memref<8x16xf32, #tpu.memory_space<vmem>>, %arg2: memref<16x128xbf16, #tpu.memory_space<vmem>>, %arg3: memref<1x128xf32, #tpu.memory_space<vmem>>, %arg4: memref<128x128xbf16, #tpu.memory_space<vmem>>, %arg5: memref<1x128xf32, #tpu.memory_space<vmem>>, %arg6: memref<128x128xbf16, #tpu.memory_space<vmem>>, %arg7: memref<1x128xf32, #tpu.memory_space<vmem>>, %arg8: memref<8x128xf32, #tpu.memory_space<vmem>>) attributes {dimension_semantics = [#tpu.dimension_semantics<parallel>], iteration_bounds = array<i64: 1>, scalar_prefetch = 0 : i64, scratch_operands = 0 : i64, tpu.core_type = #tpu.core_type<tc>, window_params = [{transform_indices = @transform_0, window_bounds = array<i64: 8, 16>}, {pipeline_mode = #tpu.pipeline_mode<synchronous>, transform_indices = @transform_1, window_bounds = array<i64: 16, 128>}, {pipeline_mode = #tpu.pipeline_mode<synchronous>, transform_indices = @transform_2, window_bounds = array<i64: 1, 128>}, {pipeline_mode = #tpu.pipeline_mode<synchronous>, transform_indices = @transform_3, window_bounds = array<i64: 128, 128>}, {pipeline_mode = #tpu.pipeline_mode<synchronous>, transform_indices = @transform_4, window_bounds = array<i64: 1, 128>}, {pipeline_mode = #tpu.pipeline_mode<synchronous>, transform_indices = @transform_5, window_bounds = array<i64: 128, 128>}, {pipeline_mode = #tpu.pipeline_mode<synchronous>, transform_indices = @transform_6, window_bounds = array<i64: 1, 128>}, {transform_indices = @transform_7, window_bounds = array<i64: 8, 128>}]} {
    %c0 = arith.constant 0 : index
    %c0_0 = arith.constant 0 : index
    %0 = vector.load %arg1[%c0, %c0_0] : memref<8x16xf32, #tpu.memory_space<vmem>>, vector<8x16xf32>
    %c0_1 = arith.constant 0 : index
    %c0_2 = arith.constant 0 : index
    %1 = vector.load %arg2[%c0_1, %c0_2] : memref<16x128xbf16, #tpu.memory_space<vmem>>, vector<16x128xbf16>
    %c0_3 = arith.constant 0 : index
    %c0_4 = arith.constant 0 : index
    %2 = vector.load %arg3[%c0_3, %c0_4] : memref<1x128xf32, #tpu.memory_space<vmem>>, vector<1x128xf32>
    %3 = arith.truncf %0 : vector<8x16xf32> to vector<8x16xbf16>
    %cst = arith.constant dense<0.000000e+00> : vector<8x128xf32>
    %4 = tpu.matmul %3, %1, %cst {dimension_numbers = #tpu.dot_dimension_numbers<[1], [0], [0], [1], [0, 0, 1, 1], [], []>} : vector<8x16xbf16>, vector<16x128xbf16>, vector<8x128xf32> -> vector<8x128xf32>
    %5 = vector.broadcast %2 : vector<1x128xf32> to vector<8x128xf32>
    %6 = arith.addf %4, %5 : vector<8x128xf32>
    %cst_5 = arith.constant 0.000000e+00 : f32
    %7 = vector.broadcast %cst_5 : f32 to vector<8x128xf32>
    %8 = arith.maximumf %6, %7 : vector<8x128xf32>
    %c0_6 = arith.constant 0 : index
    %c0_7 = arith.constant 0 : index
    %9 = vector.load %arg4[%c0_6, %c0_7] : memref<128x128xbf16, #tpu.memory_space<vmem>>, vector<128x128xbf16>
    %c0_8 = arith.constant 0 : index
    %c0_9 = arith.constant 0 : index
    %10 = vector.load %arg5[%c0_8, %c0_9] : memref<1x128xf32, #tpu.memory_space<vmem>>, vector<1x128xf32>
    %11 = arith.truncf %8 : vector<8x128xf32> to vector<8x128xbf16>
    %cst_10 = arith.constant dense<0.000000e+00> : vector<8x128xf32>
    %12 = tpu.matmul %11, %9, %cst_10 {dimension_numbers = #tpu.dot_dimension_numbers<[1], [0], [0], [1], [0, 0, 1, 1], [], []>} : vector<8x128xbf16>, vector<128x128xbf16>, vector<8x128xf32> -> vector<8x128xf32>
    %13 = vector.broadcast %10 : vector<1x128xf32> to vector<8x128xf32>
    %14 = arith.addf %12, %13 : vector<8x128xf32>
    %15 = math.tanh %14 : vector<8x128xf32>
    %c0_11 = arith.constant 0 : index
    %c0_12 = arith.constant 0 : index
    %16 = vector.load %arg6[%c0_11, %c0_12] : memref<128x128xbf16, #tpu.memory_space<vmem>>, vector<128x128xbf16>
    %c0_13 = arith.constant 0 : index
    %c0_14 = arith.constant 0 : index
    %17 = vector.load %arg7[%c0_13, %c0_14] : memref<1x128xf32, #tpu.memory_space<vmem>>, vector<1x128xf32>
    %18 = arith.truncf %15 : vector<8x128xf32> to vector<8x128xbf16>
    %cst_15 = arith.constant dense<0.000000e+00> : vector<8x128xf32>
    %19 = tpu.matmul %18, %16, %cst_15 {dimension_numbers = #tpu.dot_dimension_numbers<[1], [0], [0], [1], [0, 0, 1, 1], [], []>} : vector<8x128xbf16>, vector<128x128xbf16>, vector<8x128xf32> -> vector<8x128xf32>
    %20 = vector.broadcast %17 : vector<1x128xf32> to vector<8x128xf32>
    %21 = arith.addf %19, %20 : vector<8x128xf32>
    %22 = arith.negf %21 : vector<8x128xf32>
    %23 = math.exp %22 : vector<8x128xf32>
    %cst_16 = arith.constant 1.000000e+00 : f32
    %24 = vector.broadcast %cst_16 : f32 to vector<8x128xf32>
    %25 = arith.addf %24, %23 : vector<8x128xf32>
    %26 = arith.divf %24, %25 : vector<8x128xf32>
    %c0_17 = arith.constant 0 : index
    %c0_18 = arith.constant 0 : index
    %27 = vector.load %arg8[%c0_17, %c0_18] : memref<8x128xf32, #tpu.memory_space<vmem>>, vector<8x128xf32>
    tpu.vector_store %arg8[%c0_17, %c0_18], %26 {strides = array<i32>} : memref<8x128xf32, #tpu.memory_space<vmem>>, vector<8x128xf32>,
    return
  }
  func.func @transform_0(%arg0: i32) -> (i32, i32) {
    %c0_i32 = arith.constant 0 : i32
    %c0_i32_0 = arith.constant 0 : i32
    return %arg0, %c0_i32 : i32, i32
  }
  func.func @transform_1(%arg0: i32) -> (i32, i32) {
    %c0_i32 = arith.constant 0 : i32
    %c0_i32_0 = arith.constant 0 : i32
    %c0_i32_1 = arith.constant 0 : i32
    return %c0_i32, %c0_i32_0 : i32, i32
  }
  func.func @transform_2(%arg0: i32) -> (i32, i32) {
    %c0_i32 = arith.constant 0 : i32
    %c0_i32_0 = arith.constant 0 : i32
    %c0_i32_1 = arith.constant 0 : i32
    return %c0_i32, %c0_i32_0 : i32, i32
  }
  func.func @transform_3(%arg0: i32) -> (i32, i32) {
    %c0_i32 = arith.constant 0 : i32
    %c0_i32_0 = arith.constant 0 : i32
    %c0_i32_1 = arith.constant 0 : i32
    return %c0_i32, %c0_i32_0 : i32, i32
  }
  func.func @transform_4(%arg0: i32) -> (i32, i32) {
    %c0_i32 = arith.constant 0 : i32
    %c0_i32_0 = arith.constant 0 : i32
    %c0_i32_1 = arith.constant 0 : i32
    return %c0_i32, %c0_i32_0 : i32, i32
  }
  func.func @transform_5(%arg0: i32) -> (i32, i32) {
    %c0_i32 = arith.constant 0 : i32
    %c0_i32_0 = arith.constant 0 : i32
    %c0_i32_1 = arith.constant 0 : i32
    return %c0_i32, %c0_i32_0 : i32, i32
  }
  func.func @transform_6(%arg0: i32) -> (i32, i32) {
    %c0_i32 = arith.constant 0 : i32
    %c0_i32_0 = arith.constant 0 : i32
    %c0_i32_1 = arith.constant 0 : i32
    return %c0_i32, %c0_i32_0 : i32, i32
  }
  func.func @transform_7(%arg0: i32) -> (i32, i32) {
    %c0_i32 = arith.constant 0 : i32
    %c0_i32_0 = arith.constant 0 : i32
    return %arg0, %c0_i32 : i32, i32
  }
}

module attributes {stable_mosaic.version = 11 : i64} {
  func.func @_mlp_fused_kernel(%arg0: i32, %arg1: memref<8x16xf32, #tpu.memory_space<vmem>>, %arg2: memref<16x128xbf16, #tpu.memory_space<vmem>>, %arg3: memref<1x128xf32, #tpu.memory_space<vmem>>, %arg4: memref<128x128xbf16, #tpu.memory_space<vmem>>, %arg5: memref<1x128xf32, #tpu.memory_space<vmem>>, %arg6: memref<128x128xbf16, #tpu.memory_space<vmem>>, %arg7: memref<1x128xf32, #tpu.memory_space<vmem>>, %arg8: memref<8x128xf32, #tpu.memory_space<vmem>>) attributes {dimension_semantics = [#tpu.dimension_semantics<parallel>], iteration_bounds = array<i64: 1>, scalar_prefetch = 0 : i64, scratch_operands = 0 : i64, tpu.core_type = #tpu.core_type<tc>, window_params = [{transform_indices = @transform_0, window_bounds = array<i64: 8, 16>}, {pipeline_mode = #tpu.pipeline_mode<synchronous>, transform_indices = @transform_1, window_bounds = array<i64: 16, 128>}, {pipeline_mode = #tpu.pipeline_mode<synchronous>, transform_indices = @transform_2, window_bounds = array<i64: 1, 128>}, {pipeline_mode = #tpu.pipeline_mode<synchronous>, transform_indices = @transform_3, window_bounds = array<i64: 128, 128>}, {pipeline_mode = #tpu.pipeline_mode<synchronous>, transform_indices = @transform_4, window_bounds = array<i64: 1, 128>}, {pipeline_mode = #tpu.pipeline_mode<synchronous>, transform_indices = @transform_5, window_bounds = array<i64: 128, 128>}, {pipeline_mode = #tpu.pipeline_mode<synchronous>, transform_indices = @transform_6, window_bounds = array<i64: 1, 128>}, {transform_indices = @transform_7, window_bounds = array<i64: 8, 128>}]} {
    %c0 = arith.constant 0 : index
    %c0_0 = arith.constant 0 : index
    %0 = vector.load %arg1[%c0, %c0_0] : memref<8x16xf32, #tpu.memory_space<vmem>>, vector<8x16xf32>
    %c0_1 = arith.constant 0 : index
    %c0_2 = arith.constant 0 : index
    %1 = vector.load %arg2[%c0_1, %c0_2] : memref<16x128xbf16, #tpu.memory_space<vmem>>, vector<16x128xbf16>
    %c0_3 = arith.constant 0 : index
    %c0_4 = arith.constant 0 : index
    %2 = vector.load %arg3[%c0_3, %c0_4] : memref<1x128xf32, #tpu.memory_space<vmem>>, vector<1x128xf32>
    %3 = arith.truncf %0 : vector<8x16xf32> to vector<8x16xbf16>
    %cst = arith.constant dense<0.000000e+00> : vector<8x128xf32>
    %4 = tpu.matmul %3, %1, %cst {dimension_numbers = #tpu.dot_dimension_numbers<[1], [0], [0], [1], [0, 0, 1, 1], [], []>} : vector<8x16xbf16>, vector<16x128xbf16>, vector<8x128xf32> -> vector<8x128xf32>
    %5 = vector.broadcast %2 : vector<1x128xf32> to vector<8x128xf32>
    %6 = arith.addf %4, %5 : vector<8x128xf32>
    %cst_5 = arith.constant 0.000000e+00 : f32
    %7 = vector.broadcast %cst_5 : f32 to vector<8x128xf32>
    %8 = arith.maximumf %6, %7 : vector<8x128xf32>
    %c0_6 = arith.constant 0 : index
    %c0_7 = arith.constant 0 : index
    %9 = vector.load %arg4[%c0_6, %c0_7] : memref<128x128xbf16, #tpu.memory_space<vmem>>, vector<128x128xbf16>
    %c0_8 = arith.constant 0 : index
    %c0_9 = arith.constant 0 : index
    %10 = vector.load %arg5[%c0_8, %c0_9] : memref<1x128xf32, #tpu.memory_space<vmem>>, vector<1x128xf32>
    %11 = arith.truncf %8 : vector<8x128xf32> to vector<8x128xbf16>
    %cst_10 = arith.constant dense<0.000000e+00> : vector<8x128xf32>
    %12 = tpu.matmul %11, %9, %cst_10 {dimension_numbers = #tpu.dot_dimension_numbers<[1], [0], [0], [1], [0, 0, 1, 1], [], []>} : vector<8x128xbf16>, vector<128x128xbf16>, vector<8x128xf32> -> vector<8x128xf32>
    %13 = vector.broadcast %10 : vector<1x128xf32> to vector<8x128xf32>
    %14 = arith.addf %12, %13 : vector<8x128xf32>
    %15 = math.tanh %14 : vector<8x128xf32>
    %c0_11 = arith.constant 0 : index
    %c0_12 = arith.constant 0 : index
    %16 = vector.load %arg6[%c0_11, %c0_12] : memref<128x128xbf16, #tpu.memory_space<vmem>>, vector<128x128xbf16>
    %c0_13 = arith.constant 0 : index
    %c0_14 = arith.constant 0 : index
    %17 = vector.load %arg7[%c0_13, %c0_14] : memref<1x128xf32, #tpu.memory_space<vmem>>, vector<1x128xf32>
    %18 = arith.truncf %15 : vector<8x128xf32> to vector<8x128xbf16>
    %cst_15 = arith.constant dense<0.000000e+00> : vector<8x128xf32>
    %19 = tpu.matmul %18, %16, %cst_15 {dimension_numbers = #tpu.dot_dimension_numbers<[1], [0], [0], [1], [0, 0, 1, 1], [], []>} : vector<8x128xbf16>, vector<128x128xbf16>, vector<8x128xf32> -> vector<8x128xf32>
    %20 = vector.broadcast %17 : vector<1x128xf32> to vector<8x128xf32>
    %21 = arith.addf %19, %20 : vector<8x128xf32>
    %22 = arith.negf %21 : vector<8x128xf32>
    %23 = math.exp %22 : vector<8x128xf32>
    %cst_16 = arith.constant 1.000000e+00 : f32
    %24 = vector.broadcast %cst_16 : f32 to vector<8x128xf32>
    %25 = arith.addf %24, %23 : vector<8x128xf32>
    %26 = arith.divf %24, %25 : vector<8x128xf32>
    %c0_17 = arith.constant 0 : index
    %c0_18 = arith.constant 0 : index
    %27 = vector.load %arg8[%c0_17, %c0_18] : memref<8x128xf32, #tpu.memory_space<vmem>>, vector<8x128xf32>
    tpu.vector_store %arg8[%c0_17, %c0_18], %26 {strides = array<i32>} : memref<8x128xf32, #tpu.memory_space<vmem>>, vector<8x128xf32>,
    return
  }
  func.func @transform_0(%arg0: i32) -> (i32, i32) {
    %c0_i32 = arith.constant 0 : i32
    %c0_i32_0 = arith.constant 0 : i32
    return %arg0, %c0_i32 : i32, i32
  }
  func.func @transform_1(%arg0: i32) -> (i32, i32) {
    %c0_i32 = arith.constant 0 : i32
    %c0_i32_0 = arith.constant 0 : i32
    %c0_i32_1 = arith.constant 0 : i32
    return %c0_i32, %c0_i32_0 : i32, i32
  }
  func.func @transform_2(%arg0: i32) -> (i32, i32) {
    %c0_i32 = arith.constant 0 : i32
    %c0_i32_0 = arith.constant 0 : i32
    %c0_i32_1 = arith.constant 0 : i32
    return %c0_i32, %c0_i32_0 : i32, i32
  }
  func.func @transform_3(%arg0: i32) -> (i32, i32) {
    %c0_i32 = arith.constant 0 : i32
    %c0_i32_0 = arith.constant 0 : i32
    %c0_i32_1 = arith.constant 0 : i32
    return %c0_i32, %c0_i32_0 : i32, i32
  }
  func.func @transform_4(%arg0: i32) -> (i32, i32) {
    %c0_i32 = arith.constant 0 : i32
    %c0_i32_0 = arith.constant 0 : i32
    %c0_i32_1 = arith.constant 0 : i32
    return %c0_i32, %c0_i32_0 : i32, i32
  }
  func.func @transform_5(%arg0: i32) -> (i32, i32) {
    %c0_i32 = arith.constant 0 : i32
    %c0_i32_0 = arith.constant 0 : i32
    %c0_i32_1 = arith.constant 0 : i32
    return %c0_i32, %c0_i32_0 : i32, i32
  }
  func.func @transform_6(%arg0: i32) -> (i32, i32) {
    %c0_i32 = arith.constant 0 : i32
    %c0_i32_0 = arith.constant 0 : i32
    %c0_i32_1 = arith.constant 0 : i32
    return %c0_i32, %c0_i32_0 : i32, i32
  }
  func.func @transform_7(%arg0: i32) -> (i32, i32) {
    %c0_i32 = arith.constant 0 : i32
    %c0_i32_0 = arith.constant 0 : i32
    return %arg0, %c0_i32 : i32, i32
  }
}

</mosaic_0001>

<llo_original>
// kernel: tpu_custom_call.1
$region0: #{tpu_custom_call.1}
  #allocation0 [shape = 'u32[]', space=smem, size = 0x4, offset = 0x4, fixed_abs, tag = 'smem constant byte address 0x4 - core index']
  #allocation1 [shape = 'u32[144,128]{1,0:T(1,128)}', space=vmem, size = 0x12000, scoped, tag = 'internal scratch']
  %s0 = inlined_call_operand.hbm [shape: f32[8,16], index: 0, kind: input, shape index: {}]
  %s1 = inlined_call_operand.hbm [shape: bf16[16,128], index: 1, kind: input, shape index: {}]
  %s2 = inlined_call_operand.vmem [shape: f32[1,128], index: 2, kind: input, shape index: {}]
  %s3 = inlined_call_operand.hbm [shape: bf16[128,128], index: 3, kind: input, shape index: {}]
  %s4 = inlined_call_operand.vmem [shape: f32[1,128], index: 4, kind: input, shape index: {}]
  %s5 = inlined_call_operand.hbm [shape: bf16[128,128], index: 5, kind: input, shape index: {}]
  %s6 = inlined_call_operand.vmem [shape: f32[1,128], index: 6, kind: input, shape index: {}]
  %s7 = inlined_call_operand.hbm [shape: f32[8,128], index: 7, kind: output, shape index: {}]
  %s8 = sld [smem:[#allocation0]]
  $region54: #{tpu_custom_call.1} parent=0
    _
  %s10 = ssub.s32 1, %s8
  %s11 = scalar_select 0, %s10, %s8
  $region1: #{tpu_custom_call.1} parent=0
    #allocation2 [shape = 'u8[4096]{0}', space=vmem, size = 0x1000, scoped, tag = 'input window, operand 0, single buffered']
    #allocation3 [shape = 's32[1]{0}', space=sflag, size = 0x4, scoped, tag = 'scoped memory for tpu_custom_call.1']
    #allocation4 [shape = 's32[1]{0}', space=sflag, size = 0x4, scoped, tag = 'scoped memory for tpu_custom_call.1']
    #allocation5 [shape = 'u8[4096]{0}', space=vmem, size = 0x1000, scoped, tag = 'input window, operand 1, single buffered']
    #allocation6 [shape = 's32[1]{0}', space=sflag, size = 0x4, scoped, tag = 'scoped memory for tpu_custom_call.1']
    #allocation7 [shape = 'u8[32768]{0}', space=vmem, size = 0x8000, scoped, tag = 'input window, operand 3, single buffered']
    #allocation8 [shape = 'u8[32768]{0}', space=vmem, size = 0x8000, scoped, tag = 'input window, operand 5, single buffered']
    #allocation9 [shape = 's32[1]{0}', space=sflag, size = 0x4, scoped, tag = 'scoped memory for tpu_custom_call.1']
    #allocation10 [shape = 'u8[4096]{0}', space=vmem, size = 0x1000, scoped, tag = 'output window, operand 0, single buffered']
    %12 = vsyncpa [#allocation3], 0
    %13 = vsyncpa [#allocation6], 0
    %14 = vsyncpa [#allocation9], 0
    %15 = vsyncpa [#allocation4], 0
    // Predicated region
    $region2: #{tpu_custom_call.1} parent=1 // pred_check
      _
    $region3: #{tpu_custom_call.1} parent=1 // pred_check_branch
      %17 = sbr.rel (0) target = $region5
    $region4: #{tpu_custom_call.1} parent=1 // pred_region
      %s19 = ssub.s32 128, 128
      %20 = vsyncadd [#allocation3], %s19
      %s22 = sshll.u32 [#allocation2], 4
      %s23 = int_to_ptr.vmem [resolvable:$true] %s22
      %25 = dma.hbm_to_vmem [thread:$0]  %s0, 128, %s23, [#allocation3]
    $region5: #{tpu_custom_call.1} parent=1 // pred_fallthru
      _
    // Predicated region
    $region6: #{tpu_custom_call.1} parent=1 // pred_check
      _
    $region7: #{tpu_custom_call.1} parent=1 // pred_check_branch
      %27 = sbr.rel (0) target = $region9
    $region8: #{tpu_custom_call.1} parent=1 // pred_region
      %s29 = ssub.s32 128, 128
      %30 = vsyncadd [#allocation6], %s29
      %s31 = sshll.u32 [#allocation5], 4
      %s32 = int_to_ptr.vmem [resolvable:$true] %s31
      %37 = dma.hbm_to_vmem [thread:$0]  %s1, 128, %s32, [#allocation6], 64, 64, 4
    $region9: #{tpu_custom_call.1} parent=1 // pred_fallthru
      _
    // Predicated region
    $region10: #{tpu_custom_call.1} parent=1 // pred_check
      _
    $region11: #{tpu_custom_call.1} parent=1 // pred_check_branch
      %39 = sbr.rel (0) target = $region13
    $region12: #{tpu_custom_call.1} parent=1 // pred_region
      _
    $region13: #{tpu_custom_call.1} parent=1 // pred_fallthru
      _
    // Predicated region
    $region14: #{tpu_custom_call.1} parent=1 // pred_check
      _
    $region15: #{tpu_custom_call.1} parent=1 // pred_check_branch
      %41 = sbr.rel (0) target = $region17
    $region16: #{tpu_custom_call.1} parent=1 // pred_region
      %s43 = ssub.s32 1024, 1024
      %44 = vsyncadd [#allocation6], %s43
      %s45 = sshll.u32 [#allocation7], 4
      %s46 = int_to_ptr.vmem [resolvable:$true] %s45
      %51 = dma.hbm_to_vmem [thread:$0]  %s3, 1024, %s46, [#allocation6], 64, 64, 4
    $region17: #{tpu_custom_call.1} parent=1 // pred_fallthru
      _
    // Predicated region
    $region18: #{tpu_custom_call.1} parent=1 // pred_check
      _
    $region19: #{tpu_custom_call.1} parent=1 // pred_check_branch
      %53 = sbr.rel (0) target = $region21
    $region20: #{tpu_custom_call.1} parent=1 // pred_region
      _
    $region21: #{tpu_custom_call.1} parent=1 // pred_fallthru
      _
    // Predicated region
    $region22: #{tpu_custom_call.1} parent=1 // pred_check
      _
    $region23: #{tpu_custom_call.1} parent=1 // pred_check_branch
      %55 = sbr.rel (0) target = $region25
    $region24: #{tpu_custom_call.1} parent=1 // pred_region
      %s57 = ssub.s32 1024, 1024
      %58 = vsyncadd [#allocation9], %s57
      %s59 = sshll.u32 [#allocation8], 4
      %s60 = int_to_ptr.vmem [resolvable:$true] %s59
      %65 = dma.hbm_to_vmem [thread:$0]  %s5, 1024, %s60, [#allocation9], 64, 64, 4
    $region25: #{tpu_custom_call.1} parent=1 // pred_fallthru
      _
    // Predicated region
    $region26: #{tpu_custom_call.1} parent=1 // pred_check
      _
    $region27: #{tpu_custom_call.1} parent=1 // pred_check_branch
      %67 = sbr.rel (0) target = $region29
    $region28: #{tpu_custom_call.1} parent=1 // pred_region
      _
    $region29: #{tpu_custom_call.1} parent=1 // pred_fallthru
      _
    // Predicated region
    $region30: #{tpu_custom_call.1} parent=1 // pred_check
      _
    $region31: #{tpu_custom_call.1} parent=1 // pred_check_branch
      %69 = sbr.rel (0) target = $region33
    $region32: #{tpu_custom_call.1} parent=1 // pred_region
      %70 = dma.done [#allocation3], 128
    $region33: #{tpu_custom_call.1} parent=1 // pred_fallthru
      _
    // Predicated region
    $region34: #{tpu_custom_call.1} parent=1 // pred_check
      _
    $region35: #{tpu_custom_call.1} parent=1 // pred_check_branch
      %72 = sbr.rel (0) target = $region37
    $region36: #{tpu_custom_call.1} parent=1 // pred_region
      %73 = dma.done [#allocation6], 128
    $region37: #{tpu_custom_call.1} parent=1 // pred_fallthru
      _
    // Predicated region
    $region38: #{tpu_custom_call.1} parent=1 // pred_check
      _
    $region39: #{tpu_custom_call.1} parent=1 // pred_check_branch
      %75 = sbr.rel (0) target = $region41
    $region40: #{tpu_custom_call.1} parent=1 // pred_region
      %76 = dma.done [#allocation6], 1024
    $region41: #{tpu_custom_call.1} parent=1 // pred_fallthru
      _
    // Predicated region
    $region42: #{tpu_custom_call.1} parent=1 // pred_check
      _
    $region43: #{tpu_custom_call.1} parent=1 // pred_check_branch
      %78 = sbr.rel (0) target = $region45
    $region44: #{tpu_custom_call.1} parent=1 // pred_region
      %79 = dma.done [#allocation9], 1024
    $region45: #{tpu_custom_call.1} parent=1 // pred_fallthru
      _
    %v81 = vld [vmem:[#allocation2] sm:$0xff]
    %v82 = vld [vmem:[#allocation5] sm:$0xf]
    %v83 = vld [vmem:[#allocation5 + $0x4] sm:$0xf]
    %v84 = vld [vmem:[%s2] sm:$0x1]
    %v85 = vpack.c.bf16 %v81, %v81
    %v87 = vlaneseq
    %v88 = vshrl.u32 %v87, 7
    %v89 = vsub.s32 0, %v88
    %v90 = vrot.slane %v84, %v89
    %v94 = vunpack.c.l.b16 %v82
    %v95 = vunpack.c.l.b16 %v83
    %v96 = vpack.c.b16 %v95, %v94
    %vm98 = vcmask 130048
    %v100 = vsel %vm98, %v85, 0
    %102 = vmatprep.subr.bf16.mxu0 0
    %103 = vmatpush1.bf16.msra.mxu0 0
    %104 = vmatprep.subr.bf16.mxu0 0
    %105 = vmatpush1.bf16.msra.mxu0 0
    %106 = vmatprep.subr.bf16.mxu0 0
    %107 = vmatpush1.bf16.msra.mxu0 0
    %108 = vmatprep.subr.bf16.mxu0 0
    %109 = vmatpush1.bf16.msra.mxu0 0
    %110 = vmatprep.subr.bf16.mxu0 0
    %111 = vmatpush1.bf16.msra.mxu0 0
    %112 = vmatprep.subr.bf16.mxu0 0
    %113 = vmatpush1.bf16.msra.mxu0 0
    %114 = vmatprep.subr.bf16.mxu0 0
    %115 = vmatpush1.bf16.msra.mxu0 0
    %116 = vmatprep.subr.bf16.mxu0 0
    %117 = vmatpush1.bf16.msra.mxu0 %v96
    %118 = vmatprep.subr.bf16.mxu0 0
    %119 = vmatpush2.bf16.msra.mxu0 0
    %120 = vmatprep.subr.bf16.mxu0 0
    %121 = vmatpush2.bf16.msra.mxu0 0
    %122 = vmatprep.subr.bf16.mxu0 0
    %123 = vmatpush2.bf16.msra.mxu0 0
    %124 = vmatprep.subr.bf16.mxu0 0
    %125 = vmatpush2.bf16.msra.mxu0 0
    %126 = vmatprep.subr.bf16.mxu0 0
    %127 = vmatpush2.bf16.msra.mxu0 0
    %128 = vmatprep.subr.bf16.mxu0 0
    %129 = vmatpush2.bf16.msra.mxu0 0
    %130 = vmatprep.subr.bf16.mxu0 0
    %131 = vmatpush2.bf16.msra.mxu0 0
    %132 = vmatprep.subr.bf16.mxu0 0
    %133 = vmatpush2.bf16.msra.mxu0 0
    %134 = vmatprep.mubr.bf16.mxu0 0
    %135 = vmatmul.mubr.bf16.gmra.mxu0 %v100
    %v136 = vpop.f32.mrf.mxu0
    %v137 = vadd.f32 %v90, %v136
    %v138 = vpop.f32.mrf.mxu0
    %v139 = vpop.f32.mrf.mxu0
    %v140 = vpop.f32.mrf.mxu0
    %141 = vdwg.mxu0
    %v142 = vmax.f32 %v137, 0.0
    %v143 = vld [vmem:[#allocation7] sm:$0xf]
    %v144 = vld [vmem:[#allocation7 + $0x4] sm:$0xf]
    %v145 = vld [vmem:[#allocation7 + $0x8] sm:$0xf]
    %v146 = vld [vmem:[#allocation7 + $0xc] sm:$0xf]
    %v147 = vld [vmem:[#allocation7 + $0x10] sm:$0xf]
    %v148 = vld [vmem:[#allocation7 + $0x14] sm:$0xf]
    %v149 = vld [vmem:[#allocation7 + $0x18] sm:$0xf]
    %v150 = vld [vmem:[#allocation7 + $0x1c] sm:$0xf]
    %v151 = vld [vmem:[#allocation7 + $0x20] sm:$0xf]
    %v152 = vld [vmem:[#allocation7 + $0x24] sm:$0xf]
    %v153 = vld [vmem:[#allocation7 + $0x28] sm:$0xf]
    %v154 = vld [vmem:[#allocation7 + $0x2c] sm:$0xf]
    %v155 = vld [vmem:[#allocation7 + $0x30] sm:$0xf]
    %v156 = vld [vmem:[#allocation7 + $0x34] sm:$0xf]
    %v157 = vld [vmem:[#allocation7 + $0x38] sm:$0xf]
    %v158 = vld [vmem:[#allocation7 + $0x3c] sm:$0xf]
    %v159 = vld [vmem:[%s4] sm:$0x1]
    %v160 = vpack.c.bf16 %v142, %v142
    %v162 = vlaneseq
    %v163 = vshrl.u32 %v162, 7
    %v164 = vsub.s32 0, %v163
    %v165 = vrot.slane %v159, %v164
    %v183 = vunpack.c.l.b16 %v143
    %v184 = vunpack.c.l.b16 %v144
    %v185 = vunpack.c.l.b16 %v145
    %v186 = vunpack.c.l.b16 %v146
    %v187 = vunpack.c.l.b16 %v147
    %v188 = vunpack.c.l.b16 %v148
    %v189 = vunpack.c.l.b16 %v149
    %v190 = vunpack.c.l.b16 %v150
    %v191 = vunpack.c.l.b16 %v151
    %v192 = vunpack.c.l.b16 %v152
    %v193 = vunpack.c.l.b16 %v153
    %v194 = vunpack.c.l.b16 %v154
    %v195 = vunpack.c.l.b16 %v155
    %v196 = vunpack.c.l.b16 %v156
    %v197 = vunpack.c.l.b16 %v157
    %v198 = vunpack.c.l.b16 %v158
    %v199 = vpack.c.b16 %v184, %v183
    %v200 = vpack.c.b16 %v186, %v185
    %v201 = vpack.c.b16 %v188, %v187
    %v202 = vpack.c.b16 %v190, %v189
    %v203 = vpack.c.b16 %v192, %v191
    %v204 = vpack.c.b16 %v194, %v193
    %v205 = vpack.c.b16 %v196, %v195
    %v206 = vpack.c.b16 %v198, %v197
    %215 = vmatprep.subr.bf16.mxu0 0
    %216 = vmatpush1.bf16.msra.mxu0 %v206
    %217 = vmatprep.subr.bf16.mxu0 0
    %218 = vmatpush1.bf16.msra.mxu0 %v205
    %219 = vmatprep.subr.bf16.mxu0 0
    %220 = vmatpush1.bf16.msra.mxu0 %v204
    %221 = vmatprep.subr.bf16.mxu0 0
    %222 = vmatpush1.bf16.msra.mxu0 %v203
    %223 = vmatprep.subr.bf16.mxu0 0
    %224 = vmatpush1.bf16.msra.mxu0 %v202
    %225 = vmatprep.subr.bf16.mxu0 0
    %226 = vmatpush1.bf16.msra.mxu0 %v201
    %227 = vmatprep.subr.bf16.mxu0 0
    %228 = vmatpush1.bf16.msra.mxu0 %v200
    %229 = vmatprep.subr.bf16.mxu0 0
    %230 = vmatpush1.bf16.msra.mxu0 %v199
    %231 = vmatprep.subr.bf16.mxu0 0
    %232 = vmatpush2.bf16.msra.mxu0 0
    %233 = vmatprep.subr.bf16.mxu0 0
    %234 = vmatpush2.bf16.msra.mxu0 0
    %235 = vmatprep.subr.bf16.mxu0 0
    %236 = vmatpush2.bf16.msra.mxu0 0
    %237 = vmatprep.subr.bf16.mxu0 0
    %238 = vmatpush2.bf16.msra.mxu0 0
    %239 = vmatprep.subr.bf16.mxu0 0
    %240 = vmatpush2.bf16.msra.mxu0 0
    %241 = vmatprep.subr.bf16.mxu0 0
    %242 = vmatpush2.bf16.msra.mxu0 0
    %243 = vmatprep.subr.bf16.mxu0 0
    %244 = vmatpush2.bf16.msra.mxu0 0
    %245 = vmatprep.subr.bf16.mxu0 0
    %246 = vmatpush2.bf16.msra.mxu0 0
    %247 = vmatprep.mubr.bf16.mxu0 0
    %248 = vmatmul.mubr.bf16.gmra.mxu0 %v160
    %v249 = vpop.f32.mrf.mxu0
    %v250 = vadd.f32 %v165, %v249
    %v251 = vpop.f32.mrf.mxu0
    %v252 = vpop.f32.mrf.mxu0
    %v253 = vpop.f32.mrf.mxu0
    %254 = vdwg.mxu0
    %v255 = vtanh.pop %v250
    %v256 = vld [vmem:[#allocation8] sm:$0xf]
    %v257 = vld [vmem:[#allocation8 + $0x4] sm:$0xf]
    %v258 = vld [vmem:[#allocation8 + $0x8] sm:$0xf]
    %v259 = vld [vmem:[#allocation8 + $0xc] sm:$0xf]
    %v260 = vld [vmem:[#allocation8 + $0x10] sm:$0xf]
    %v261 = vld [vmem:[#allocation8 + $0x14] sm:$0xf]
    %v262 = vld [vmem:[#allocation8 + $0x18] sm:$0xf]
    %v263 = vld [vmem:[#allocation8 + $0x1c] sm:$0xf]
    %v264 = vld [vmem:[#allocation8 + $0x20] sm:$0xf]
    %v265 = vld [vmem:[#allocation8 + $0x24] sm:$0xf]
    %v266 = vld [vmem:[#allocation8 + $0x28] sm:$0xf]
    %v267 = vld [vmem:[#allocation8 + $0x2c] sm:$0xf]
    %v268 = vld [vmem:[#allocation8 + $0x30] sm:$0xf]
    %v269 = vld [vmem:[#allocation8 + $0x34] sm:$0xf]
    %v270 = vld [vmem:[#allocation8 + $0x38] sm:$0xf]
    %v271 = vld [vmem:[#allocation8 + $0x3c] sm:$0xf]
    %v272 = vld [vmem:[%s6] sm:$0x1]
    %v273 = vpack.c.bf16 %v255, %v255
    %v275 = vlaneseq
    %v276 = vshrl.u32 %v275, 7
    %v277 = vsub.s32 0, %v276
    %v278 = vrot.slane %v272, %v277
    %v296 = vunpack.c.l.b16 %v256
    %v297 = vunpack.c.l.b16 %v257
    %v298 = vunpack.c.l.b16 %v258
    %v299 = vunpack.c.l.b16 %v259
    %v300 = vunpack.c.l.b16 %v260
    %v301 = vunpack.c.l.b16 %v261
    %v302 = vunpack.c.l.b16 %v262
    %v303 = vunpack.c.l.b16 %v263
    %v304 = vunpack.c.l.b16 %v264
    %v305 = vunpack.c.l.b16 %v265
    %v306 = vunpack.c.l.b16 %v266
    %v307 = vunpack.c.l.b16 %v267
    %v308 = vunpack.c.l.b16 %v268
    %v309 = vunpack.c.l.b16 %v269
    %v310 = vunpack.c.l.b16 %v270
    %v311 = vunpack.c.l.b16 %v271
    %v312 = vpack.c.b16 %v297, %v296
    %v313 = vpack.c.b16 %v299, %v298
    %v314 = vpack.c.b16 %v301, %v300
    %v315 = vpack.c.b16 %v303, %v302
    %v316 = vpack.c.b16 %v305, %v304
    %v317 = vpack.c.b16 %v307, %v306
    %v318 = vpack.c.b16 %v309, %v308
    %v319 = vpack.c.b16 %v311, %v310
    %328 = vmatprep.subr.bf16.mxu0 0
    %329 = vmatpush1.bf16.msra.mxu0 %v319
    %330 = vmatprep.subr.bf16.mxu0 0
    %331 = vmatpush1.bf16.msra.mxu0 %v318
    %332 = vmatprep.subr.bf16.mxu0 0
    %333 = vmatpush1.bf16.msra.mxu0 %v317
    %334 = vmatprep.subr.bf16.mxu0 0
    %335 = vmatpush1.bf16.msra.mxu0 %v316
    %336 = vmatprep.subr.bf16.mxu0 0
    %337 = vmatpush1.bf16.msra.mxu0 %v315
    %338 = vmatprep.subr.bf16.mxu0 0
    %339 = vmatpush1.bf16.msra.mxu0 %v314
    %340 = vmatprep.subr.bf16.mxu0 0
    %341 = vmatpush1.bf16.msra.mxu0 %v313
    %342 = vmatprep.subr.bf16.mxu0 0
    %343 = vmatpush1.bf16.msra.mxu0 %v312
    %344 = vmatprep.subr.bf16.mxu0 0
    %345 = vmatpush2.bf16.msra.mxu0 0
    %346 = vmatprep.subr.bf16.mxu0 0
    %347 = vmatpush2.bf16.msra.mxu0 0
    %348 = vmatprep.subr.bf16.mxu0 0
    %349 = vmatpush2.bf16.msra.mxu0 0
    %350 = vmatprep.subr.bf16.mxu0 0
    %351 = vmatpush2.bf16.msra.mxu0 0
    %352 = vmatprep.subr.bf16.mxu0 0
    %353 = vmatpush2.bf16.msra.mxu0 0
    %354 = vmatprep.subr.bf16.mxu0 0
    %355 = vmatpush2.bf16.msra.mxu0 0
    %356 = vmatprep.subr.bf16.mxu0 0
    %357 = vmatpush2.bf16.msra.mxu0 0
    %358 = vmatprep.subr.bf16.mxu0 0
    %359 = vmatpush2.bf16.msra.mxu0 0
    %360 = vmatprep.mubr.bf16.mxu0 0
    %361 = vmatmul.mubr.bf16.gmra.mxu0 %v273
    %v362 = vpop.f32.mrf.mxu0
    %v363 = vadd.f32 %v278, %v362
    %v364 = vpop.f32.mrf.mxu0
    %v365 = vpop.f32.mrf.mxu0
    %v366 = vpop.f32.mrf.mxu0
    %367 = vdwg.mxu0
    %v368 = vxor.u32 %v363, 2147483648
    %v369 = vmul.f32 %v368, 1.442695
    %v370 = vpow.pop %v369
    %v371 = vadd.f32 %v370, 1.0
    %v372 = vrcp.pop %v371
    %v373 = vmul.f32 1.0, %v372
    %374 = vst [vmem:[#allocation10] sm:$0xff] %v373
    // Predicated region
    $region46: #{tpu_custom_call.1} parent=1 // pred_check
      _
    $region47: #{tpu_custom_call.1} parent=1 // pred_check_branch
      %376 = sbr.rel (0) target = $region49
    $region48: #{tpu_custom_call.1} parent=1 // pred_region
      %s378 = ssub.s32 128, 128
      %379 = vsyncadd [#allocation4], %s378
      %s381 = sshll.u32 [#allocation10], 4
      %s382 = int_to_ptr.vmem [resolvable:$true] %s381
      %384 = dma.vmem_to_hbm [thread:$0]  %s382, 128, %s7, [#allocation4]
    $region49: #{tpu_custom_call.1} parent=1 // pred_fallthru
      _
    // Predicated region
    $region50: #{tpu_custom_call.1} parent=1 // pred_check
      _
    $region51: #{tpu_custom_call.1} parent=1 // pred_check_branch
      %386 = sbr.rel (0) target = $region53
    $region52: #{tpu_custom_call.1} parent=1 // pred_region
      %387 = dma.done [#allocation4], 128
    $region53: #{tpu_custom_call.1} parent=1 // pred_fallthru
      _
    %388 = vsyncpa [#allocation3], 1
    %389 = vsyncpa [#allocation6], 1
    %390 = vsyncpa [#allocation9], 1
    %391 = vsyncpa [#allocation4], 1

// kernel: tpu_custom_call.1
$region0: #{tpu_custom_call.1}
  #allocation0 [shape = 'u32[]', space=smem, size = 0x4, offset = 0x4, fixed_abs, tag = 'smem constant byte address 0x4 - core index']
  #allocation1 [shape = 'u32[144,128]{1,0:T(1,128)}', space=vmem, size = 0x12000, scoped, tag = 'internal scratch']
  %s0 = inlined_call_operand.hbm [shape: f32[8,16], index: 0, kind: input, shape index: {}]
  %s1 = inlined_call_operand.hbm [shape: bf16[16,128], index: 1, kind: input, shape index: {}]
  %s2 = inlined_call_operand.vmem [shape: f32[1,128], index: 2, kind: input, shape index: {}]
  %s3 = inlined_call_operand.hbm [shape: bf16[128,128], index: 3, kind: input, shape index: {}]
  %s4 = inlined_call_operand.vmem [shape: f32[1,128], index: 4, kind: input, shape index: {}]
  %s5 = inlined_call_operand.hbm [shape: bf16[128,128], index: 5, kind: input, shape index: {}]
  %s6 = inlined_call_operand.vmem [shape: f32[1,128], index: 6, kind: input, shape index: {}]
  %s7 = inlined_call_operand.hbm [shape: f32[8,128], index: 7, kind: output, shape index: {}]
  %s8 = sld [smem:[#allocation0]]
  $region54: #{tpu_custom_call.1} parent=0
    _
  %s10 = ssub.s32 1, %s8
  %s11 = scalar_select 0, %s10, %s8
  $region1: #{tpu_custom_call.1} parent=0
    #allocation2 [shape = 'u8[4096]{0}', space=vmem, size = 0x1000, scoped, tag = 'input window, operand 0, single buffered']
    #allocation3 [shape = 's32[1]{0}', space=sflag, size = 0x4, scoped, tag = 'scoped memory for tpu_custom_call.1']
    #allocation4 [shape = 's32[1]{0}', space=sflag, size = 0x4, scoped, tag = 'scoped memory for tpu_custom_call.1']
    #allocation5 [shape = 'u8[4096]{0}', space=vmem, size = 0x1000, scoped, tag = 'input window, operand 1, single buffered']
    #allocation6 [shape = 's32[1]{0}', space=sflag, size = 0x4, scoped, tag = 'scoped memory for tpu_custom_call.1']
    #allocation7 [shape = 'u8[32768]{0}', space=vmem, size = 0x8000, scoped, tag = 'input window, operand 3, single buffered']
    #allocation8 [shape = 'u8[32768]{0}', space=vmem, size = 0x8000, scoped, tag = 'input window, operand 5, single buffered']
    #allocation9 [shape = 's32[1]{0}', space=sflag, size = 0x4, scoped, tag = 'scoped memory for tpu_custom_call.1']
    #allocation10 [shape = 'u8[4096]{0}', space=vmem, size = 0x1000, scoped, tag = 'output window, operand 0, single buffered']
    %12 = vsyncpa [#allocation3], 0
    %13 = vsyncpa [#allocation6], 0
    %14 = vsyncpa [#allocation9], 0
    %15 = vsyncpa [#allocation4], 0
    // Predicated region
    $region2: #{tpu_custom_call.1} parent=1 // pred_check
      _
    $region3: #{tpu_custom_call.1} parent=1 // pred_check_branch
      %17 = sbr.rel (0) target = $region5
    $region4: #{tpu_custom_call.1} parent=1 // pred_region
      %s19 = ssub.s32 128, 128
      %20 = vsyncadd [#allocation3], %s19
      %s22 = sshll.u32 [#allocation2], 4
      %s23 = int_to_ptr.vmem [resolvable:$true] %s22
      %25 = dma.hbm_to_vmem [thread:$0]  %s0, 128, %s23, [#allocation3]
    $region5: #{tpu_custom_call.1} parent=1 // pred_fallthru
      _
    // Predicated region
    $region6: #{tpu_custom_call.1} parent=1 // pred_check
      _
    $region7: #{tpu_custom_call.1} parent=1 // pred_check_branch
      %27 = sbr.rel (0) target = $region9
    $region8: #{tpu_custom_call.1} parent=1 // pred_region
      %s29 = ssub.s32 128, 128
      %30 = vsyncadd [#allocation6], %s29
      %s31 = sshll.u32 [#allocation5], 4
      %s32 = int_to_ptr.vmem [resolvable:$true] %s31
      %37 = dma.hbm_to_vmem [thread:$0]  %s1, 128, %s32, [#allocation6], 64, 64, 4
    $region9: #{tpu_custom_call.1} parent=1 // pred_fallthru
      _
    // Predicated region
    $region10: #{tpu_custom_call.1} parent=1 // pred_check
      _
    $region11: #{tpu_custom_call.1} parent=1 // pred_check_branch
      %39 = sbr.rel (0) target = $region13
    $region12: #{tpu_custom_call.1} parent=1 // pred_region
      _
    $region13: #{tpu_custom_call.1} parent=1 // pred_fallthru
      _
    // Predicated region
    $region14: #{tpu_custom_call.1} parent=1 // pred_check
      _
    $region15: #{tpu_custom_call.1} parent=1 // pred_check_branch
      %41 = sbr.rel (0) target = $region17
    $region16: #{tpu_custom_call.1} parent=1 // pred_region
      %s43 = ssub.s32 1024, 1024
      %44 = vsyncadd [#allocation6], %s43
      %s45 = sshll.u32 [#allocation7], 4
      %s46 = int_to_ptr.vmem [resolvable:$true] %s45
      %51 = dma.hbm_to_vmem [thread:$0]  %s3, 1024, %s46, [#allocation6], 64, 64, 4
    $region17: #{tpu_custom_call.1} parent=1 // pred_fallthru
      _
    // Predicated region
    $region18: #{tpu_custom_call.1} parent=1 // pred_check
      _
    $region19: #{tpu_custom_call.1} parent=1 // pred_check_branch
      %53 = sbr.rel (0) target = $region21
    $region20: #{tpu_custom_call.1} parent=1 // pred_region
      _
    $region21: #{tpu_custom_call.1} parent=1 // pred_fallthru
      _
    // Predicated region
    $region22: #{tpu_custom_call.1} parent=1 // pred_check
      _
    $region23: #{tpu_custom_call.1} parent=1 // pred_check_branch
      %55 = sbr.rel (0) target = $region25
    $region24: #{tpu_custom_call.1} parent=1 // pred_region
      %s57 = ssub.s32 1024, 1024
      %58 = vsyncadd [#allocation9], %s57
      %s59 = sshll.u32 [#allocation8], 4
      %s60 = int_to_ptr.vmem [resolvable:$true] %s59
      %65 = dma.hbm_to_vmem [thread:$0]  %s5, 1024, %s60, [#allocation9], 64, 64, 4
    $region25: #{tpu_custom_call.1} parent=1 // pred_fallthru
      _
    // Predicated region
    $region26: #{tpu_custom_call.1} parent=1 // pred_check
      _
    $region27: #{tpu_custom_call.1} parent=1 // pred_check_branch
      %67 = sbr.rel (0) target = $region29
    $region28: #{tpu_custom_call.1} parent=1 // pred_region
      _
    $region29: #{tpu_custom_call.1} parent=1 // pred_fallthru
      _
    // Predicated region
    $region30: #{tpu_custom_call.1} parent=1 // pred_check
      _
    $region31: #{tpu_custom_call.1} parent=1 // pred_check_branch
      %69 = sbr.rel (0) target = $region33
    $region32: #{tpu_custom_call.1} parent=1 // pred_region
      %70 = dma.done [#allocation3], 128
    $region33: #{tpu_custom_call.1} parent=1 // pred_fallthru
      _
    // Predicated region
    $region34: #{tpu_custom_call.1} parent=1 // pred_check
      _
    $region35: #{tpu_custom_call.1} parent=1 // pred_check_branch
      %72 = sbr.rel (0) target = $region37
    $region36: #{tpu_custom_call.1} parent=1 // pred_region
      %73 = dma.done [#allocation6], 128
    $region37: #{tpu_custom_call.1} parent=1 // pred_fallthru
      _
    // Predicated region
    $region38: #{tpu_custom_call.1} parent=1 // pred_check
      _
    $region39: #{tpu_custom_call.1} parent=1 // pred_check_branch
      %75 = sbr.rel (0) target = $region41
    $region40: #{tpu_custom_call.1} parent=1 // pred_region
      %76 = dma.done [#allocation6], 1024
    $region41: #{tpu_custom_call.1} parent=1 // pred_fallthru
      _
    // Predicated region
    $region42: #{tpu_custom_call.1} parent=1 // pred_check
      _
    $region43: #{tpu_custom_call.1} parent=1 // pred_check_branch
      %78 = sbr.rel (0) target = $region45
    $region44: #{tpu_custom_call.1} parent=1 // pred_region
      %79 = dma.done [#allocation9], 1024
    $region45: #{tpu_custom_call.1} parent=1 // pred_fallthru
      _
    %v81 = vld [vmem:[#allocation2] sm:$0xff]
    %v82 = vld [vmem:[#allocation5] sm:$0xf]
    %v83 = vld [vmem:[#allocation5 + $0x4] sm:$0xf]
    %v84 = vld [vmem:[%s2] sm:$0x1]
    %v85 = vpack.c.bf16 %v81, %v81
    %v87 = vlaneseq
    %v88 = vshrl.u32 %v87, 7
    %v89 = vsub.s32 0, %v88
    %v90 = vrot.slane %v84, %v89
    %v94 = vunpack.c.l.b16 %v82
    %v95 = vunpack.c.l.b16 %v83
    %v96 = vpack.c.b16 %v95, %v94
    %vm98 = vcmask 130048
    %v100 = vsel %vm98, %v85, 0
    %102 = vmatprep.subr.bf16.mxu0 0
    %103 = vmatpush1.bf16.msra.mxu0 0
    %104 = vmatprep.subr.bf16.mxu0 0
    %105 = vmatpush1.bf16.msra.mxu0 0
    %106 = vmatprep.subr.bf16.mxu0 0
    %107 = vmatpush1.bf16.msra.mxu0 0
    %108 = vmatprep.subr.bf16.mxu0 0
    %109 = vmatpush1.bf16.msra.mxu0 0
    %110 = vmatprep.subr.bf16.mxu0 0
    %111 = vmatpush1.bf16.msra.mxu0 0
    %112 = vmatprep.subr.bf16.mxu0 0
    %113 = vmatpush1.bf16.msra.mxu0 0
    %114 = vmatprep.subr.bf16.mxu0 0
    %115 = vmatpush1.bf16.msra.mxu0 0
    %116 = vmatprep.subr.bf16.mxu0 0
    %117 = vmatpush1.bf16.msra.mxu0 %v96
    %118 = vmatprep.subr.bf16.mxu0 0
    %119 = vmatpush2.bf16.msra.mxu0 0
    %120 = vmatprep.subr.bf16.mxu0 0
    %121 = vmatpush2.bf16.msra.mxu0 0
    %122 = vmatprep.subr.bf16.mxu0 0
    %123 = vmatpush2.bf16.msra.mxu0 0
    %124 = vmatprep.subr.bf16.mxu0 0
    %125 = vmatpush2.bf16.msra.mxu0 0
    %126 = vmatprep.subr.bf16.mxu0 0
    %127 = vmatpush2.bf16.msra.mxu0 0
    %128 = vmatprep.subr.bf16.mxu0 0
    %129 = vmatpush2.bf16.msra.mxu0 0
    %130 = vmatprep.subr.bf16.mxu0 0
    %131 = vmatpush2.bf16.msra.mxu0 0
    %132 = vmatprep.subr.bf16.mxu0 0
    %133 = vmatpush2.bf16.msra.mxu0 0
    %134 = vmatprep.mubr.bf16.mxu0 0
    %135 = vmatmul.mubr.bf16.gmra.mxu0 %v100
    %v136 = vpop.f32.mrf.mxu0
    %v137 = vadd.f32 %v90, %v136
    %v138 = vpop.f32.mrf.mxu0
    %v139 = vpop.f32.mrf.mxu0
    %v140 = vpop.f32.mrf.mxu0
    %141 = vdwg.mxu0
    %v142 = vmax.f32 %v137, 0.0
    %v143 = vld [vmem:[#allocation7] sm:$0xf]
    %v144 = vld [vmem:[#allocation7 + $0x4] sm:$0xf]
    %v145 = vld [vmem:[#allocation7 + $0x8] sm:$0xf]
    %v146 = vld [vmem:[#allocation7 + $0xc] sm:$0xf]
    %v147 = vld [vmem:[#allocation7 + $0x10] sm:$0xf]
    %v148 = vld [vmem:[#allocation7 + $0x14] sm:$0xf]
    %v149 = vld [vmem:[#allocation7 + $0x18] sm:$0xf]
    %v150 = vld [vmem:[#allocation7 + $0x1c] sm:$0xf]
    %v151 = vld [vmem:[#allocation7 + $0x20] sm:$0xf]
    %v152 = vld [vmem:[#allocation7 + $0x24] sm:$0xf]
    %v153 = vld [vmem:[#allocation7 + $0x28] sm:$0xf]
    %v154 = vld [vmem:[#allocation7 + $0x2c] sm:$0xf]
    %v155 = vld [vmem:[#allocation7 + $0x30] sm:$0xf]
    %v156 = vld [vmem:[#allocation7 + $0x34] sm:$0xf]
    %v157 = vld [vmem:[#allocation7 + $0x38] sm:$0xf]
    %v158 = vld [vmem:[#allocation7 + $0x3c] sm:$0xf]
    %v159 = vld [vmem:[%s4] sm:$0x1]
    %v160 = vpack.c.bf16 %v142, %v142
    %v162 = vlaneseq
    %v163 = vshrl.u32 %v162, 7
    %v164 = vsub.s32 0, %v163
    %v165 = vrot.slane %v159, %v164
    %v183 = vunpack.c.l.b16 %v143
    %v184 = vunpack.c.l.b16 %v144
    %v185 = vunpack.c.l.b16 %v145
    %v186 = vunpack.c.l.b16 %v146
    %v187 = vunpack.c.l.b16 %v147
    %v188 = vunpack.c.l.b16 %v148
    %v189 = vunpack.c.l.b16 %v149
    %v190 = vunpack.c.l.b16 %v150
    %v191 = vunpack.c.l.b16 %v151
    %v192 = vunpack.c.l.b16 %v152
    %v193 = vunpack.c.l.b16 %v153
    %v194 = vunpack.c.l.b16 %v154
    %v195 = vunpack.c.l.b16 %v155
    %v196 = vunpack.c.l.b16 %v156
    %v197 = vunpack.c.l.b16 %v157
    %v198 = vunpack.c.l.b16 %v158
    %v199 = vpack.c.b16 %v184, %v183
    %v200 = vpack.c.b16 %v186, %v185
    %v201 = vpack.c.b16 %v188, %v187
    %v202 = vpack.c.b16 %v190, %v189
    %v203 = vpack.c.b16 %v192, %v191
    %v204 = vpack.c.b16 %v194, %v193
    %v205 = vpack.c.b16 %v196, %v195
    %v206 = vpack.c.b16 %v198, %v197
    %215 = vmatprep.subr.bf16.mxu0 0
    %216 = vmatpush1.bf16.msra.mxu0 %v206
    %217 = vmatprep.subr.bf16.mxu0 0
    %218 = vmatpush1.bf16.msra.mxu0 %v205
    %219 = vmatprep.subr.bf16.mxu0 0
    %220 = vmatpush1.bf16.msra.mxu0 %v204
    %221 = vmatprep.subr.bf16.mxu0 0
    %222 = vmatpush1.bf16.msra.mxu0 %v203
    %223 = vmatprep.subr.bf16.mxu0 0
    %224 = vmatpush1.bf16.msra.mxu0 %v202
    %225 = vmatprep.subr.bf16.mxu0 0
    %226 = vmatpush1.bf16.msra.mxu0 %v201
    %227 = vmatprep.subr.bf16.mxu0 0
    %228 = vmatpush1.bf16.msra.mxu0 %v200
    %229 = vmatprep.subr.bf16.mxu0 0
    %230 = vmatpush1.bf16.msra.mxu0 %v199
    %231 = vmatprep.subr.bf16.mxu0 0
    %232 = vmatpush2.bf16.msra.mxu0 0
    %233 = vmatprep.subr.bf16.mxu0 0
    %234 = vmatpush2.bf16.msra.mxu0 0
    %235 = vmatprep.subr.bf16.mxu0 0
    %236 = vmatpush2.bf16.msra.mxu0 0
    %237 = vmatprep.subr.bf16.mxu0 0
    %238 = vmatpush2.bf16.msra.mxu0 0
    %239 = vmatprep.subr.bf16.mxu0 0
    %240 = vmatpush2.bf16.msra.mxu0 0
    %241 = vmatprep.subr.bf16.mxu0 0
    %242 = vmatpush2.bf16.msra.mxu0 0
    %243 = vmatprep.subr.bf16.mxu0 0
    %244 = vmatpush2.bf16.msra.mxu0 0
    %245 = vmatprep.subr.bf16.mxu0 0
    %246 = vmatpush2.bf16.msra.mxu0 0
    %247 = vmatprep.mubr.bf16.mxu0 0
    %248 = vmatmul.mubr.bf16.gmra.mxu0 %v160
    %v249 = vpop.f32.mrf.mxu0
    %v250 = vadd.f32 %v165, %v249
    %v251 = vpop.f32.mrf.mxu0
    %v252 = vpop.f32.mrf.mxu0
    %v253 = vpop.f32.mrf.mxu0
    %254 = vdwg.mxu0
    %v255 = vtanh.pop %v250
    %v256 = vld [vmem:[#allocation8] sm:$0xf]
    %v257 = vld [vmem:[#allocation8 + $0x4] sm:$0xf]
    %v258 = vld [vmem:[#allocation8 + $0x8] sm:$0xf]
    %v259 = vld [vmem:[#allocation8 + $0xc] sm:$0xf]
    %v260 = vld [vmem:[#allocation8 + $0x10] sm:$0xf]
    %v261 = vld [vmem:[#allocation8 + $0x14] sm:$0xf]
    %v262 = vld [vmem:[#allocation8 + $0x18] sm:$0xf]
    %v263 = vld [vmem:[#allocation8 + $0x1c] sm:$0xf]
    %v264 = vld [vmem:[#allocation8 + $0x20] sm:$0xf]
    %v265 = vld [vmem:[#allocation8 + $0x24] sm:$0xf]
    %v266 = vld [vmem:[#allocation8 + $0x28] sm:$0xf]
    %v267 = vld [vmem:[#allocation8 + $0x2c] sm:$0xf]
    %v268 = vld [vmem:[#allocation8 + $0x30] sm:$0xf]
    %v269 = vld [vmem:[#allocation8 + $0x34] sm:$0xf]
    %v270 = vld [vmem:[#allocation8 + $0x38] sm:$0xf]
    %v271 = vld [vmem:[#allocation8 + $0x3c] sm:$0xf]
    %v272 = vld [vmem:[%s6] sm:$0x1]
    %v273 = vpack.c.bf16 %v255, %v255
    %v275 = vlaneseq
    %v276 = vshrl.u32 %v275, 7
    %v277 = vsub.s32 0, %v276
    %v278 = vrot.slane %v272, %v277
    %v296 = vunpack.c.l.b16 %v256
    %v297 = vunpack.c.l.b16 %v257
    %v298 = vunpack.c.l.b16 %v258
    %v299 = vunpack.c.l.b16 %v259
    %v300 = vunpack.c.l.b16 %v260
    %v301 = vunpack.c.l.b16 %v261
    %v302 = vunpack.c.l.b16 %v262
    %v303 = vunpack.c.l.b16 %v263
    %v304 = vunpack.c.l.b16 %v264
    %v305 = vunpack.c.l.b16 %v265
    %v306 = vunpack.c.l.b16 %v266
    %v307 = vunpack.c.l.b16 %v267
    %v308 = vunpack.c.l.b16 %v268
    %v309 = vunpack.c.l.b16 %v269
    %v310 = vunpack.c.l.b16 %v270
    %v311 = vunpack.c.l.b16 %v271
    %v312 = vpack.c.b16 %v297, %v296
    %v313 = vpack.c.b16 %v299, %v298
    %v314 = vpack.c.b16 %v301, %v300
    %v315 = vpack.c.b16 %v303, %v302
    %v316 = vpack.c.b16 %v305, %v304
    %v317 = vpack.c.b16 %v307, %v306
    %v318 = vpack.c.b16 %v309, %v308
    %v319 = vpack.c.b16 %v311, %v310
    %328 = vmatprep.subr.bf16.mxu0 0
    %329 = vmatpush1.bf16.msra.mxu0 %v319
    %330 = vmatprep.subr.bf16.mxu0 0
    %331 = vmatpush1.bf16.msra.mxu0 %v318
    %332 = vmatprep.subr.bf16.mxu0 0
    %333 = vmatpush1.bf16.msra.mxu0 %v317
    %334 = vmatprep.subr.bf16.mxu0 0
    %335 = vmatpush1.bf16.msra.mxu0 %v316
    %336 = vmatprep.subr.bf16.mxu0 0
    %337 = vmatpush1.bf16.msra.mxu0 %v315
    %338 = vmatprep.subr.bf16.mxu0 0
    %339 = vmatpush1.bf16.msra.mxu0 %v314
    %340 = vmatprep.subr.bf16.mxu0 0
    %341 = vmatpush1.bf16.msra.mxu0 %v313
    %342 = vmatprep.subr.bf16.mxu0 0
    %343 = vmatpush1.bf16.msra.mxu0 %v312
    %344 = vmatprep.subr.bf16.mxu0 0
    %345 = vmatpush2.bf16.msra.mxu0 0
    %346 = vmatprep.subr.bf16.mxu0 0
    %347 = vmatpush2.bf16.msra.mxu0 0
    %348 = vmatprep.subr.bf16.mxu0 0
    %349 = vmatpush2.bf16.msra.mxu0 0
    %350 = vmatprep.subr.bf16.mxu0 0
    %351 = vmatpush2.bf16.msra.mxu0 0
    %352 = vmatprep.subr.bf16.mxu0 0
    %353 = vmatpush2.bf16.msra.mxu0 0
    %354 = vmatprep.subr.bf16.mxu0 0
    %355 = vmatpush2.bf16.msra.mxu0 0
    %356 = vmatprep.subr.bf16.mxu0 0
    %357 = vmatpush2.bf16.msra.mxu0 0
    %358 = vmatprep.subr.bf16.mxu0 0
    %359 = vmatpush2.bf16.msra.mxu0 0
    %360 = vmatprep.mubr.bf16.mxu0 0
    %361 = vmatmul.mubr.bf16.gmra.mxu0 %v273
    %v362 = vpop.f32.mrf.mxu0
    %v363 = vadd.f32 %v278, %v362
    %v364 = vpop.f32.mrf.mxu0
    %v365 = vpop.f32.mrf.mxu0
    %v366 = vpop.f32.mrf.mxu0
    %367 = vdwg.mxu0
    %v368 = vxor.u32 %v363, 2147483648
    %v369 = vmul.f32 %v368, 1.442695
    %v370 = vpow.pop %v369
    %v371 = vadd.f32 %v370, 1.0
    %v372 = vrcp.pop %v371
    %v373 = vmul.f32 1.0, %v372
    %374 = vst [vmem:[#allocation10] sm:$0xff] %v373
    // Predicated region
    $region46: #{tpu_custom_call.1} parent=1 // pred_check
      _
    $region47: #{tpu_custom_call.1} parent=1 // pred_check_branch
      %376 = sbr.rel (0) target = $region49
    $region48: #{tpu_custom_call.1} parent=1 // pred_region
      %s378 = ssub.s32 128, 128
      %379 = vsyncadd [#allocation4], %s378
      %s381 = sshll.u32 [#allocation10], 4
      %s382 = int_to_ptr.vmem [resolvable:$true] %s381
      %384 = dma.vmem_to_hbm [thread:$0]  %s382, 128, %s7, [#allocation4]
    $region49: #{tpu_custom_call.1} parent=1 // pred_fallthru
      _
    // Predicated region
    $region50: #{tpu_custom_call.1} parent=1 // pred_check
      _
    $region51: #{tpu_custom_call.1} parent=1 // pred_check_branch
      %386 = sbr.rel (0) target = $region53
    $region52: #{tpu_custom_call.1} parent=1 // pred_region
      %387 = dma.done [#allocation4], 128
    $region53: #{tpu_custom_call.1} parent=1 // pred_fallthru
      _
    %388 = vsyncpa [#allocation3], 1
    %389 = vsyncpa [#allocation6], 1
    %390 = vsyncpa [#allocation9], 1
    %391 = vsyncpa [#allocation4], 1

</llo_original>
